<compile_context>
chip_gen: v7x
topology: tpu7x:2x2x1
jax: 0.10.0
libtpu: 0.0.40
codegen_flags: <defaults>
</compile_context>

<pallas_src>
import functools

import jax
import jax.numpy as jnp
from jax import lax
from jax.experimental import pallas as pl
from jax.experimental.pallas import tpu as pltpu


def _round_up(x, m):
    return ((x + m - 1) // m) * m


def rbm_kernel(x_ref, w_ref, bh_ref, bv_ref, out_ref):
    """One batch tile of the RBM forward: two MXU matmuls + sigmoids in VMEM."""
    # f32 -> bf16 cast happens here on the VPU (no wrapper pre-pass over x).
    x = x_ref[...].astype(jnp.bfloat16)       # (bm, nv_p)
    w = w_ref[...]                             # (nh_p, nv_p) bf16, resident

    # h = sigmoid(x @ W^T + bh): contract last dims of both operands so the
    # transposed operand goes straight to the MXU (no W^T copy, no XLU work).
    zh = lax.dot_general(
        x, w,
        dimension_numbers=(((1,), (1,)), ((), ())),
        preferred_element_type=jnp.float32,
    ) + bh_ref[...]                            # (bm, nh_p) f32
    # sigmoid via tanh: a single EUP op per element (vs exp + reciprocal).
    h = 0.5 * jnp.tanh(0.5 * zh) + 0.5

    # v = sigmoid(h @ W + bv)
    zv = jnp.dot(
        h.astype(jnp.bfloat16), w, preferred_element_type=jnp.float32
    ) + bv_ref[...]                            # (bm, nv_p) f32
    v = 0.5 * jnp.tanh(0.5 * zv) + 0.5

    out_ref[...] = v.astype(out_ref.dtype)


def _vmem_budget(bm, nv_p, nh_p, x_bytes, out_bytes):
    return (
        2 * bm * nv_p * x_bytes      # x tiles (double-buffered)
        + 2 * bm * nv_p * out_bytes  # out tiles (double-buffered)
        + nh_p * nv_p * 2            # W bf16 (single-buffered via Buffered(1))
        + (nh_p + nv_p) * 4          # bias rows (single-buffered)
        + bm * nh_p * 4              # h intermediate (f32)
        + 2 * bm * nv_p * 4          # zv / v intermediates (f32)
    )


@functools.partial(jax.jit, static_argnames=("bm", "out_dtype"))
def rbm_forward(x, W, bh, bv, *, bm=256, out_dtype=jnp.float32):
    B, n_visible = x.shape
    n_hidden = W.shape[0]

    # Lane-dense padding (multiples of 128 on lane dims, 8 on sublane dim).
    nv_p = _round_up(n_visible, 128)
    nh_p = _round_up(n_hidden, 128)
    bm = max(8, _round_up(bm, 8))

    B8 = _round_up(B, 8)
    if B8 >= 16:
        # Keep at least 2 grid steps so the "parallel" batch axis can be
        # sharded across v7x's two TensorCores; never exceed requested bm.
        bm_eff = min(bm, _round_up((B8 + 1) // 2, 8))
    else:
        bm_eff = B8

    # Shrink the batch tile until the plan fits a ~48 MiB VMEM cap (headroom
    # below v7x's 64 MiB per-TC VMEM; v5e/v6e have 128 MiB and always fit).
    x_bytes = jnp.dtype(x.dtype).itemsize
    out_bytes = jnp.dtype(out_dtype).itemsize
    VMEM_CAP = 48 << 20
    while _vmem_budget(bm_eff, nv_p, nh_p, x_bytes, out_bytes) > VMEM_CAP and bm_eff > 8:
        bm_eff = max(8, _round_up(bm_eff // 2, 8))
    # TODO(synk): if W alone (nh_p*nv_p*2 bytes) ever exceeds the cap, add a
    # K-reduction grid axis over n_visible / tile W over n_hidden instead of
    # relying on the larger vmem_limit requested below.
    vmem_limit = max(
        16 << 20,
        _vmem_budget(bm_eff, nv_p, nh_p, x_bytes, out_bytes) + (4 << 20),
    )

    B_p = _round_up(B, bm_eff)
    grid = (B_p // bm_eff,)

    # Zero padding is inert: padded visible cols of x/W are zero (no effect on
    # the contraction), padded hidden units see bh=0 -> h=0.5 but multiply zero
    # W rows in matmul 2, padded outputs are sliced off below.
    pad_b = B_p - B
    pad_v = nv_p - n_visible
    if pad_b or pad_v:
        x_p = jnp.pad(x, ((0, pad_b), (0, pad_v)))   # keep dtype; cast in-kernel
    else:
        x_p = x                                       # no wrapper copy at all
    W_p = jnp.pad(W.astype(jnp.bfloat16),
                  ((0, nh_p - n_hidden), (0, nv_p - n_visible)))
    bh_p = jnp.pad(bh, (0, nh_p - n_hidden)).reshape(1, nh_p).astype(jnp.float32)
    bv_p = jnp.pad(bv, (0, nv_p - n_visible)).reshape(1, nv_p).astype(jnp.float32)

    out_p = pl.pallas_call(
        rbm_kernel,
        out_shape=jax.ShapeDtypeStruct((B_p, nv_p), out_dtype),
        grid_spec=pltpu.PrefetchScalarGridSpec(
            num_scalar_prefetch=0,
            grid=grid,
            in_specs=[
                # Batch tile of x: pipelined (double-buffered by default).
                pl.BlockSpec((bm_eff, nv_p), lambda i: (i, 0)),
                # Grid-invariant operands: single-buffered (constant index_map,
                # so a second buffer only wastes VMEM — matters on v7x).
                pl.BlockSpec((nh_p, nv_p), lambda i: (0, 0),
                             pipeline_mode=pl.Buffered(1)),
                pl.BlockSpec((1, nh_p), lambda i: (0, 0),
                             pipeline_mode=pl.Buffered(1)),
                pl.BlockSpec((1, nv_p), lambda i: (0, 0),
                             pipeline_mode=pl.Buffered(1)),
            ],
            out_specs=pl.BlockSpec((bm_eff, nv_p), lambda i: (i, 0)),
        ),
        compiler_params=pltpu.CompilerParams(
            dimension_semantics=("parallel",),
            vmem_limit_bytes=vmem_limit,
        ),
    )(x_p, W_p, bh_p, bv_p)

    return out_p[:B, :n_visible]


def rbm_forward_ref(x, W, bh, bv):
    h = jax.nn.sigmoid(x @ W.T + bh)
    v = jax.nn.sigmoid(h @ W + bv)
    return v


if __name__ == "__main__":
    # Small, deterministic synthetic setup (mirrors RBM(n_visible, n_hidden)).
    # Non-multiples of 128 on purpose to exercise the padding path; B=48 gives
    # a 2-step grid (splittable across v7x's two TensorCores).
    B, n_visible, n_hidden = 48, 160, 96

    key = jax.random.PRNGKey(0)
    k_w, k_bv, k_bh, k_x = jax.random.split(key, 4)

    W = jax.random.normal(k_w, (n_hidden, n_visible), dtype=jnp.float32)
    bv = jax.random.normal(k_bv, (n_visible,), dtype=jnp.float32)
    bh = jax.random.normal(k_bh, (n_hidden,), dtype=jnp.float32)
    x = jax.random.normal(k_x, (B, n_visible), dtype=jnp.float32)

    v = rbm_forward(x, W, bh, bv)
    v = jax.block_until_ready(v)

    v_ref = rbm_forward_ref(x, W, bh, bv)
    assert v.shape == (B, n_visible)
    # bf16 matmul inputs -> loosened tolerance vs the f32 reference.
    assert jnp.allclose(v, v_ref, atol=2e-2, rtol=2e-2), "mismatch vs reference"

    print("KERNEL_OK")
</pallas_src>

<mosaic_0001>
module attributes {stable_mosaic.version = 11 : i64} {
  func.func @rbm_kernel(%arg0: i32, %arg1: memref<24x256xf32, #tpu.memory_space<vmem>>, %arg2: memref<128x256xbf16, #tpu.memory_space<vmem>>, %arg3: memref<1x128xf32, #tpu.memory_space<vmem>>, %arg4: memref<1x256xf32, #tpu.memory_space<vmem>>, %arg5: memref<24x256xf32, #tpu.memory_space<vmem>>) attributes {dimension_semantics = [#tpu.dimension_semantics<parallel>], iteration_bounds = array<i64: 2>, scalar_prefetch = 0 : i64, scratch_operands = 0 : i64, tpu.core_type = #tpu.core_type<tc>, window_params = [{transform_indices = @transform_0, window_bounds = array<i64: 24, 256>}, {pipeline_mode = #tpu.pipeline_mode<synchronous>, transform_indices = @transform_1, window_bounds = array<i64: 128, 256>}, {pipeline_mode = #tpu.pipeline_mode<synchronous>, transform_indices = @transform_2, window_bounds = array<i64: 1, 128>}, {pipeline_mode = #tpu.pipeline_mode<synchronous>, transform_indices = @transform_3, window_bounds = array<i64: 1, 256>}, {transform_indices = @transform_4, window_bounds = array<i64: 24, 256>}]} {
    %c0 = arith.constant 0 : index
    %c0_0 = arith.constant 0 : index
    %0 = vector.load %arg1[%c0, %c0_0] : memref<24x256xf32, #tpu.memory_space<vmem>>, vector<24x256xf32>
    %1 = arith.truncf %0 : vector<24x256xf32> to vector<24x256xbf16>
    %c0_1 = arith.constant 0 : index
    %c0_2 = arith.constant 0 : index
    %2 = vector.load %arg2[%c0_1, %c0_2] : memref<128x256xbf16, #tpu.memory_space<vmem>>, vector<128x256xbf16>
    %cst = arith.constant dense<0.000000e+00> : vector<24x128xf32>
    %3 = tpu.matmul %1, %2, %cst {dimension_numbers = #tpu.dot_dimension_numbers<[1], [1], [0], [0], [0, 0, 1, 0], [], []>} : vector<24x256xbf16>, vector<128x256xbf16>, vector<24x128xf32> -> vector<24x128xf32>
    %c0_3 = arith.constant 0 : index
    %c0_4 = arith.constant 0 : index
    %4 = vector.load %arg3[%c0_3, %c0_4] : memref<1x128xf32, #tpu.memory_space<vmem>>, vector<1x128xf32>
    %5 = vector.broadcast %4 : vector<1x128xf32> to vector<24x128xf32>
    %6 = arith.addf %3, %5 : vector<24x128xf32>
    %cst_5 = arith.constant 5.000000e-01 : f32
    %7 = vector.broadcast %cst_5 : f32 to vector<24x128xf32>
    %8 = arith.mulf %7, %6 : vector<24x128xf32>
    %9 = math.tanh %8 : vector<24x128xf32>
    %cst_6 = arith.constant 5.000000e-01 : f32
    %10 = vector.broadcast %cst_6 : f32 to vector<24x128xf32>
    %11 = arith.mulf %10, %9 : vector<24x128xf32>
    %cst_7 = arith.constant 5.000000e-01 : f32
    %12 = vector.broadcast %cst_7 : f32 to vector<24x128xf32>
    %13 = arith.addf %11, %12 : vector<24x128xf32>
    %14 = arith.truncf %13 : vector<24x128xf32> to vector<24x128xbf16>
    %cst_8 = arith.constant dense<0.000000e+00> : vector<24x256xf32>
    %15 = tpu.matmul %14, %2, %cst_8 {dimension_numbers = #tpu.dot_dimension_numbers<[1], [0], [0], [1], [0, 0, 1, 1], [], []>} : vector<24x128xbf16>, vector<128x256xbf16>, vector<24x256xf32> -> vector<24x256xf32>
    %c0_9 = arith.constant 0 : index
    %c0_10 = arith.constant 0 : index
    %16 = vector.load %arg4[%c0_9, %c0_10] : memref<1x256xf32, #tpu.memory_space<vmem>>, vector<1x256xf32>
    %17 = vector.broadcast %16 : vector<1x256xf32> to vector<24x256xf32>
    %18 = arith.addf %15, %17 : vector<24x256xf32>
    %cst_11 = arith.constant 5.000000e-01 : f32
    %19 = vector.broadcast %cst_11 : f32 to vector<24x256xf32>
    %20 = arith.mulf %19, %18 : vector<24x256xf32>
    %21 = math.tanh %20 : vector<24x256xf32>
    %cst_12 = arith.constant 5.000000e-01 : f32
    %22 = vector.broadcast %cst_12 : f32 to vector<24x256xf32>
    %23 = arith.mulf %22, %21 : vector<24x256xf32>
    %cst_13 = arith.constant 5.000000e-01 : f32
    %24 = vector.broadcast %cst_13 : f32 to vector<24x256xf32>
    %25 = arith.addf %23, %24 : vector<24x256xf32>
    %c0_14 = arith.constant 0 : index
    %c0_15 = arith.constant 0 : index
    %26 = vector.load %arg5[%c0_14, %c0_15] : memref<24x256xf32, #tpu.memory_space<vmem>>, vector<24x256xf32>
    tpu.vector_store %arg5[%c0_14, %c0_15], %25 {strides = array<i32>} : memref<24x256xf32, #tpu.memory_space<vmem>>, vector<24x256xf32>,
    return
  }
  func.func @transform_0(%arg0: i32) -> (i32, i32) {
    %c0_i32 = arith.constant 0 : i32
    %c0_i32_0 = arith.constant 0 : i32
    return %arg0, %c0_i32 : i32, i32
  }
  func.func @transform_1(%arg0: i32) -> (i32, i32) {
    %c0_i32 = arith.constant 0 : i32
    %c0_i32_0 = arith.constant 0 : i32
    %c0_i32_1 = arith.constant 0 : i32
    return %c0_i32, %c0_i32_0 : i32, i32
  }
  func.func @transform_2(%arg0: i32) -> (i32, i32) {
    %c0_i32 = arith.constant 0 : i32
    %c0_i32_0 = arith.constant 0 : i32
    %c0_i32_1 = arith.constant 0 : i32
    return %c0_i32, %c0_i32_0 : i32, i32
  }
  func.func @transform_3(%arg0: i32) -> (i32, i32) {
    %c0_i32 = arith.constant 0 : i32
    %c0_i32_0 = arith.constant 0 : i32
    %c0_i32_1 = arith.constant 0 : i32
    return %c0_i32, %c0_i32_0 : i32, i32
  }
  func.func @transform_4(%arg0: i32) -> (i32, i32) {
    %c0_i32 = arith.constant 0 : i32
    %c0_i32_0 = arith.constant 0 : i32
    return %arg0, %c0_i32 : i32, i32
  }
}

</mosaic_0001>

<llo_original>
// kernel: rbm_forward.1
$region0: #{rbm_forward.1}
  #allocation0 [shape = 'u32[]', space=smem, size = 0x4, offset = 0x4, fixed_abs, tag = 'smem constant byte address 0x4 - core index']
  #allocation1 [shape = 'u32[144,128]{1,0:T(1,128)}', space=vmem, size = 0x12000, scoped, tag = 'internal scratch']
  %s0 = inlined_call_operand.vmem [shape: f32[48,256], index: 0, kind: input, shape index: {}]
  %s1 = inlined_call_operand.vmem [shape: bf16[128,256], index: 1, kind: input, shape index: {}]
  %s2 = inlined_call_operand.vmem [shape: f32[1,128], index: 2, kind: input, shape index: {}]
  %s3 = inlined_call_operand.vmem [shape: f32[1,256], index: 3, kind: input, shape index: {}]
  %s4 = inlined_call_operand.hbm [shape: f32[48,256], index: 4, kind: output, shape index: {}]
  %s5 = sld [smem:[#allocation0]]
  $region49: #{rbm_forward.1} parent=0
    _
  %s7 = ssub.s32 1, %s5
  %s8 = scalar_select 0, %s7, %s5
  $region1: #{rbm_forward.1} parent=0
    #allocation2 [shape = 'u8[49152]{0}', space=vmem, size = 0xc000, scoped, tag = 'output window, operand 0']
    #allocation3 [shape = 's32[2]{0}', space=sflag, size = 0x8, scoped, tag = 'scoped memory for rbm_forward.1']
    %9 = vsyncpa [#allocation3], 0
    %s10 = scalar_lea.sflag [#allocation3], 1
    %11 = vsyncpa %s10, 0
    loop: start=0, step=1, limit=4
    $region2: #{rbm_forward.1} parent=1 // loop_pre_header
      _
    $region3: #{rbm_forward.1} parent=1 // loop_header
      %s13 = sphi 0, %s17
      %p14 = scmp.ge.s32.totalorder %s13, 4
      %s23 = sphi 0, %s25
      %s26 = sphi 0, %s23
      %s27 = sphi 0, %s26
      %s43 = sphi 0, %s27
      %s47 = sphi 0, %s47
      %s49 = sphi 0, %s47
      %s50 = sphi 0, %s49
      %s64 = sphi 0, %s50
      %s68 = sphi 0, %s68
      %s70 = sphi 0, %s68
      %s71 = sphi 0, %s70
      %s85 = sphi 0, %s71
      %s89 = sphi 0, %s89
      %s91 = sphi 0, %s89
      %s92 = sphi 0, %s91
      %s106 = sphi 0, %s92
      %s112 = sphi 0, %s114
      %s115 = sphi 0, %s112
      %s116 = sphi 0, %s115
      %s132 = sphi 0, %s116
    $region4: #{rbm_forward.1} parent=1 // loop_header_branch
      %16 = sbr.rel (%p14) target = $region8
    $region5: #{rbm_forward.1} parent=1 // loop_body
      %s18 = ssub.s32 %s13, 1
      %s19 = ssub.s32 %s13, 2
      %s20 = sadd.s32 %s13, 1
      %s21 = ssub.s32 %s13, %s20
      %p22 = scmp.eq.s32.totalorder %s21, 0
      %s24 = sadd.s32 %s23, 1
      %s25 = scalar_select %p22, %s23, %s24
      %p28 = pneg %p22
      %p29 = scmp.eq.s32.totalorder %s13, 1
      %p30 = por %p28, %p29
      %p31 = scmp.ne.s32.totalorder %s23, %s26
      %p32 = scmp.eq.s32.totalorder %s13, 0
      %p33 = por %p31, %p32
      %p34 = scmp.ne.s32.totalorder %s23, %s26
      %p35 = scmp.eq.s32.totalorder %s18, 1
      %p36 = por %p34, %p35
      %p37 = scmp.ne.s32.totalorder %s26, %s27
      %p38 = scmp.eq.s32.totalorder %s18, 0
      %p39 = por %p37, %p38
      %p40 = scmp.ne.s32.totalorder %s26, %s27
      %p41 = scmp.eq.s32.totalorder %s19, 1
      %p42 = por %p40, %p41
      %p44 = scmp.ne.s32.totalorder %s27, %s43
      %p45 = scmp.eq.s32.totalorder %s19, 0
      %p46 = por %p44, %p45
      %s48 = sadd.s32 %s47, 1
      %p51 = scmp.eq.s32.totalorder %s13, 1
      %p52 = scmp.ne.s32.totalorder %s47, %s49
      %p53 = scmp.eq.s32.totalorder %s13, 0
      %p54 = por %p52, %p53
      %p55 = scmp.ne.s32.totalorder %s47, %s49
      %p56 = scmp.eq.s32.totalorder %s18, 1
      %p57 = por %p55, %p56
      %p58 = scmp.ne.s32.totalorder %s49, %s50
      %p59 = scmp.eq.s32.totalorder %s18, 0
      %p60 = por %p58, %p59
      %p61 = scmp.ne.s32.totalorder %s49, %s50
      %p62 = scmp.eq.s32.totalorder %s19, 1
      %p63 = por %p61, %p62
      %p65 = scmp.ne.s32.totalorder %s50, %s64
      %p66 = scmp.eq.s32.totalorder %s19, 0
      %p67 = por %p65, %p66
      %s69 = sadd.s32 %s68, 1
      %p72 = scmp.eq.s32.totalorder %s13, 1
      %p73 = scmp.ne.s32.totalorder %s68, %s70
      %p74 = scmp.eq.s32.totalorder %s13, 0
      %p75 = por %p73, %p74
      %p76 = scmp.ne.s32.totalorder %s68, %s70
      %p77 = scmp.eq.s32.totalorder %s18, 1
      %p78 = por %p76, %p77
      %p79 = scmp.ne.s32.totalorder %s70, %s71
      %p80 = scmp.eq.s32.totalorder %s18, 0
      %p81 = por %p79, %p80
      %p82 = scmp.ne.s32.totalorder %s70, %s71
      %p83 = scmp.eq.s32.totalorder %s19, 1
      %p84 = por %p82, %p83
      %p86 = scmp.ne.s32.totalorder %s71, %s85
      %p87 = scmp.eq.s32.totalorder %s19, 0
      %p88 = por %p86, %p87
      %s90 = sadd.s32 %s89, 1
      %p93 = scmp.eq.s32.totalorder %s13, 1
      %p94 = scmp.ne.s32.totalorder %s89, %s91
      %p95 = scmp.eq.s32.totalorder %s13, 0
      %p96 = por %p94, %p95
      %p97 = scmp.ne.s32.totalorder %s89, %s91
      %p98 = scmp.eq.s32.totalorder %s18, 1
      %p99 = por %p97, %p98
      %p100 = scmp.ne.s32.totalorder %s91, %s92
      %p101 = scmp.eq.s32.totalorder %s18, 0
      %p102 = por %p100, %p101
      %p103 = scmp.ne.s32.totalorder %s91, %s92
      %p104 = scmp.eq.s32.totalorder %s19, 1
      %p105 = por %p103, %p104
      %p107 = scmp.ne.s32.totalorder %s92, %s106
      %p108 = scmp.eq.s32.totalorder %s19, 0
      %p109 = por %p107, %p108
      %s110 = ssub.s32 %s13, %s20
      %p111 = scmp.eq.s32.totalorder %s110, 0
      %s113 = sadd.s32 %s112, 1
      %s114 = scalar_select %p111, %s112, %s113
      %p117 = pneg %p111
      %p118 = scmp.eq.s32.totalorder %s13, 1
      %p119 = por %p117, %p118
      %p120 = scmp.ne.s32.totalorder %s112, %s115
      %p121 = scmp.eq.s32.totalorder %s13, 0
      %p122 = por %p120, %p121
      %p123 = scmp.ne.s32.totalorder %s112, %s115
      %p124 = scmp.eq.s32.totalorder %s18, 1
      %p125 = por %p123, %p124
      %p126 = scmp.ne.s32.totalorder %s115, %s116
      %p127 = scmp.eq.s32.totalorder %s18, 0
      %p128 = por %p126, %p127
      %p129 = scmp.ne.s32.totalorder %s115, %s116
      %p130 = scmp.eq.s32.totalorder %s19, 1
      %p131 = por %p129, %p130
      %p133 = scmp.ne.s32.totalorder %s116, %s132
      %p134 = scmp.eq.s32.totalorder %s19, 0
      %p135 = por %p133, %p134
      %p136 = scmp.le.s32.totalorder 1, %s13
      %p137 = scmp.lt.s32.totalorder %s13, 3
      %p138 = pnand %p136, %p137
      %p139 = pneg %p138
      // Predicated region
      $region9: #{rbm_forward.1} parent=5 // pred_check
        _
      $region10: #{rbm_forward.1} parent=5 // pred_check_branch
        %141 = sbr.rel (%p138) target = $region12
      $region11: #{rbm_forward.1} parent=5 // pred_region
        %s142 = ssub.s32 %s13, 1
        // Predicated region
        $region13: #{rbm_forward.1} parent=11 // pred_check
          %p143 = pneg %p60
        $region14: #{rbm_forward.1} parent=11 // pred_check_branch
          %145 = sbr.rel (%p143) target = $region16
        $region15: #{rbm_forward.1} parent=11 // pred_region
          _
        $region16: #{rbm_forward.1} parent=11 // pred_fallthru
          _
        // Predicated region
        $region17: #{rbm_forward.1} parent=11 // pred_check
          %p146 = pneg %p81
        $region18: #{rbm_forward.1} parent=11 // pred_check_branch
          %148 = sbr.rel (%p146) target = $region20
        $region19: #{rbm_forward.1} parent=11 // pred_region
          _
        $region20: #{rbm_forward.1} parent=11 // pred_fallthru
          _
        // Predicated region
        $region21: #{rbm_forward.1} parent=11 // pred_check
          %p149 = pneg %p102
        $region22: #{rbm_forward.1} parent=11 // pred_check_branch
          %151 = sbr.rel (%p149) target = $region24
        $region23: #{rbm_forward.1} parent=11 // pred_region
          _
        $region24: #{rbm_forward.1} parent=11 // pred_fallthru
          _
      $region12: #{rbm_forward.1} parent=5 // pred_fallthru
        _
      %p152 = scmp.lt.s32.totalorder %s13, 2
      // Predicated region
      $region25: #{rbm_forward.1} parent=5 // pred_check
        %p153 = pneg %p152
      $region26: #{rbm_forward.1} parent=5 // pred_check_branch
        %155 = sbr.rel (%p153) target = $region28
      $region27: #{rbm_forward.1} parent=5 // pred_region
        // Predicated region
        $region29: #{rbm_forward.1} parent=27 // pred_check
          %p156 = pneg %p33
        $region30: #{rbm_forward.1} parent=27 // pred_check_branch
          %158 = sbr.rel (%p156) target = $region32
        $region31: #{rbm_forward.1} parent=27 // pred_region
          %s159 = smul.u32 3, %s13
          %p160 = scmp.lt.s32.totalorder %s159, 5
          %s161 = scalar_select %p160, %s159, 5
          %s162 = smul.addr %s161, 2
          %s163 = smul.addr %s162, 8
          %s164 = scalar_lea.vmem %s0, %s163
          %s165 = smul.u32 3, %s13
        $region32: #{rbm_forward.1} parent=27 // pred_fallthru
          _
      $region28: #{rbm_forward.1} parent=5 // pred_fallthru
        _
      %p166 = scmp.le.s32.totalorder 1, %s13
      %p167 = scmp.lt.s32.totalorder %s13, 3
      %p168 = pnand %p166, %p167
      %p169 = pneg %p168
      // Predicated region
      $region33: #{rbm_forward.1} parent=5 // pred_check
        _
      $region34: #{rbm_forward.1} parent=5 // pred_check_branch
        %171 = sbr.rel (%p168) target = $region36
      $region35: #{rbm_forward.1} parent=5 // pred_region
        %s172 = ssub.s32 %s13, 1
        %s173 = smul.u32 3, %s18
        %p174 = scmp.lt.s32.totalorder %s173, 5
        %s175 = scalar_select %p174, %s173, 5
        %s176 = smul.addr %s175, 2
        %s177 = smul.addr %s176, 8
        %s178 = scalar_lea.vmem %s0, %s177
        %p179 = pneg %p39
        %p180 = pneg %p36
        %p181 = pneg %p60
        %p182 = pneg %p57
        %p183 = pneg %p81
        %p184 = pneg %p78
        %p185 = pneg %p102
        %p186 = pneg %p99
        %p187 = pneg %p128
        %p188 = pneg %p125
        %s189 = sand.u32 %s115, 1
        %s190 = scalar_lea.sflag [#allocation3], %s189
        %s191 = sand.u32 %s115, 1
        %s192 = smul.addr %s191, 48
        %s193 = scalar_lea.vmem [#allocation2], %s192
        %s194 = smul.u32 3, %s18
        %p195 = scmp.lt.s32.totalorder %s194, 5
        %s196 = scalar_select %p195, %s194, 5
        %s197 = smul.addr %s196, 2
        %s198 = smul.addr %s197, 8
        %s199 = scalar_lea.vmem %s0, %s198
        %s200 = smul.u32 3, %s18
        %s201 = smul.u32 3, %s18
        %v203 = vld [vmem:[%s199] sm:$0xff]
        %v204 = vld [vmem:[%s199 + $0x8] sm:$0xff]
        %v205 = vld [vmem:[%s199 + $0x10] sm:$0xff]
        %v206 = vld [vmem:[%s199 + $0x18] sm:$0xff]
        %v207 = vld [vmem:[%s199 + $0x20] sm:$0xff]
        %v208 = vld [vmem:[%s199 + $0x28] sm:$0xff]
        %v209 = vpack.c.bf16 %v205, %v203
        %v210 = vpack.c.bf16 %v206, %v204
        %v211 = vpack.c.bf16 %v207, %v207
        %v212 = vpack.c.bf16 %v208, %v208
        %v213 = vld [vmem:[%s1] sm:$0xff]
        %v214 = vld [vmem:[%s1 + $0x8] sm:$0xff]
        %v215 = vld [vmem:[%s1 + $0x10] sm:$0xff]
        %v216 = vld [vmem:[%s1 + $0x18] sm:$0xff]
        %v217 = vld [vmem:[%s1 + $0x20] sm:$0xff]
        %v218 = vld [vmem:[%s1 + $0x28] sm:$0xff]
        %v219 = vld [vmem:[%s1 + $0x30] sm:$0xff]
        %v220 = vld [vmem:[%s1 + $0x38] sm:$0xff]
        %v221 = vld [vmem:[%s1 + $0x40] sm:$0xff]
        %v222 = vld [vmem:[%s1 + $0x48] sm:$0xff]
        %v223 = vld [vmem:[%s1 + $0x50] sm:$0xff]
        %v224 = vld [vmem:[%s1 + $0x58] sm:$0xff]
        %v225 = vld [vmem:[%s1 + $0x60] sm:$0xff]
        %v226 = vld [vmem:[%s1 + $0x68] sm:$0xff]
        %v227 = vld [vmem:[%s1 + $0x70] sm:$0xff]
        %v228 = vld [vmem:[%s1 + $0x78] sm:$0xff]
        %v229 = vld [vmem:[%s2] sm:$0x1]
        %v231 = vlaneseq
        %v232 = vshrl.u32 %v231, 7
        %v233 = vsub.s32 0, %v232
        %v234 = vrot.slane %v229, %v233
        %v252 = vunpack.c.l.b16 %v213
        %v253 = vunpack.c.h.b16 %v213
        %v254 = vunpack.c.l.b16 %v214
        %v255 = vunpack.c.h.b16 %v214
        %v256 = vunpack.c.l.b16 %v215
        %v257 = vunpack.c.h.b16 %v215
        %v258 = vunpack.c.l.b16 %v216
        %v259 = vunpack.c.h.b16 %v216
        %v260 = vunpack.c.l.b16 %v217
        %v261 = vunpack.c.h.b16 %v217
        %v262 = vunpack.c.l.b16 %v218
        %v263 = vunpack.c.h.b16 %v218
        %v264 = vunpack.c.l.b16 %v219
        %v265 = vunpack.c.h.b16 %v219
        %v266 = vunpack.c.l.b16 %v220
        %v267 = vunpack.c.h.b16 %v220
        %v268 = vunpack.c.l.b16 %v221
        %v269 = vunpack.c.h.b16 %v221
        %v270 = vunpack.c.l.b16 %v222
        %v271 = vunpack.c.h.b16 %v222
        %v272 = vunpack.c.l.b16 %v223
        %v273 = vunpack.c.h.b16 %v223
        %v274 = vunpack.c.l.b16 %v224
        %v275 = vunpack.c.h.b16 %v224
        %v276 = vunpack.c.l.b16 %v225
        %v277 = vunpack.c.h.b16 %v225
        %v278 = vunpack.c.l.b16 %v226
        %v279 = vunpack.c.h.b16 %v226
        %v280 = vunpack.c.l.b16 %v227
        %v281 = vunpack.c.h.b16 %v227
        %v282 = vunpack.c.l.b16 %v228
        %v283 = vunpack.c.h.b16 %v228
        %v284 = vpack.c.b16 %v254, %v252
        %v285 = vpack.c.b16 %v255, %v253
        %v286 = vpack.c.b16 %v258, %v256
        %v287 = vpack.c.b16 %v259, %v257
        %v288 = vpack.c.b16 %v262, %v260
        %v289 = vpack.c.b16 %v263, %v261
        %v290 = vpack.c.b16 %v266, %v264
        %v291 = vpack.c.b16 %v267, %v265
        %v292 = vpack.c.b16 %v270, %v268
        %v293 = vpack.c.b16 %v271, %v269
        %v294 = vpack.c.b16 %v274, %v272
        %v295 = vpack.c.b16 %v275, %v273
        %v296 = vpack.c.b16 %v278, %v276
        %v297 = vpack.c.b16 %v279, %v277
        %v298 = vpack.c.b16 %v282, %v280
        %v299 = vpack.c.b16 %v283, %v281
        %316 = vmatprep.subr.bf16.mxu0 %v285
        %317 = vmatpush1.bf16.xpose.msra.mxu0 %v284
        %318 = vmatprep.subr.bf16.mxu0 %v287
        %319 = vmatpush1.bf16.xpose.msra.mxu0 %v286
        %320 = vmatprep.subr.bf16.mxu0 %v289
        %321 = vmatpush1.bf16.xpose.msra.mxu0 %v288
        %322 = vmatprep.subr.bf16.mxu0 %v291
        %323 = vmatpush1.bf16.xpose.msra.mxu0 %v290
        %324 = vmatprep.subr.bf16.mxu0 %v293
        %325 = vmatpush1.bf16.xpose.msra.mxu0 %v292
        %326 = vmatprep.subr.bf16.mxu0 %v295
        %327 = vmatpush1.bf16.xpose.msra.mxu0 %v294
        %328 = vmatprep.subr.bf16.mxu0 %v297
        %329 = vmatpush1.bf16.xpose.msra.mxu0 %v296
        %330 = vmatprep.subr.bf16.mxu0 %v299
        %331 = vmatpush1.bf16.xpose.msra.mxu0 %v298
        %332 = vmatprep.subr.bf16.mxu0 0
        %333 = vmatpush1.bf16.xpose.msra.mxu0 0
        %334 = vmatprep.subr.bf16.mxu0 0
        %335 = vmatpush1.bf16.xpose.msra.mxu0 0
        %336 = vmatprep.subr.bf16.mxu0 0
        %337 = vmatpush1.bf16.xpose.msra.mxu0 0
        %338 = vmatprep.subr.bf16.mxu0 0
        %339 = vmatpush1.bf16.xpose.msra.mxu0 0
        %340 = vmatprep.subr.bf16.mxu0 0
        %341 = vmatpush1.bf16.xpose.msra.mxu0 0
        %342 = vmatprep.subr.bf16.mxu0 0
        %343 = vmatpush1.bf16.xpose.msra.mxu0 0
        %344 = vmatprep.subr.bf16.mxu0 0
        %345 = vmatpush1.bf16.xpose.msra.mxu0 0
        %346 = vmatprep.subr.bf16.mxu0 0
        %347 = vmatpush1.bf16.xpose.msra.mxu0 0
        %348 = vmatprep.mubr.bf16.mxu0 %v210
        %349 = vmatmul.mubr.bf16.gmra.mrb[0].mxu0 %v209
        %v350 = vpop.f32.mrb[0].mxu0
        %v351 = vadd.f32 %v234, %v350
        %v352 = vpop.f32.mrb[0].mxu0
        %v353 = vpop.f32.mrb[0].mxu0
        %v354 = vadd.f32 %v234, %v353
        %v355 = vpop.f32.mrb[0].mxu0
        %356 = vmatprep.mubr.bf16.mxu0 %v212
        %357 = vmatmul.mubr.bf16.gmra.mrb[0].mxu0 %v211
        %v358 = vpop.f32.mrb[0].mxu0
        %v359 = vadd.f32 %v234, %v358
        %v360 = vpop.f32.mrb[0].mxu0
        %v361 = vpop.f32.mrb[0].mxu0
        %v362 = vpop.f32.mrb[0].mxu0
        %363 = vdwg.mxu0
        %v364 = vmul.f32 %v351, 0.5
        %v365 = vmul.f32 %v354, 0.5
        %v366 = vmul.f32 %v359, 0.5
        %v367 = vtanh.pop %v364
        %v368 = vtanh.pop %v365
        %v369 = vtanh.pop %v366
        %v370 = vmul.f32 %v367, 0.5
        %v371 = vmul.f32 %v368, 0.5
        %v372 = vmul.f32 %v369, 0.5
        %v373 = vadd.f32 %v370, 0.5
        %v374 = vadd.f32 %v371, 0.5
        %v375 = vadd.f32 %v372, 0.5
        %v376 = vpack.c.bf16 %v374, %v373
        %v377 = vpack.c.bf16 %v375, %v375
        %v378 = vld [vmem:[%s3] sm:$0x3]
        %v380 = vlaneseq
        %v381 = vshrl.u32 %v380, 7
        %v382 = vsub.s32 0, %v381
        %v383 = vrot.slane %v378, %v382
        %v384 = vlaneseq
        %v385 = vshrl.u32 %v384, 7
        %v386 = vsub.s32 1, %v385
        %v387 = vrot.slane %v378, %v386
        %390 = vmatprep.subr.bf16.mxu0 %v285
        %391 = vmatpush1.bf16.msra.mxu0 %v284
        %392 = vmatprep.subr.bf16.mxu0 %v287
        %393 = vmatpush1.bf16.msra.mxu0 %v286
        %394 = vmatprep.subr.bf16.mxu0 %v289
        %395 = vmatpush1.bf16.msra.mxu0 %v288
        %396 = vmatprep.subr.bf16.mxu0 %v291
        %397 = vmatpush1.bf16.msra.mxu0 %v290
        %398 = vmatprep.subr.bf16.mxu0 %v293
        %399 = vmatpush1.bf16.msra.mxu0 %v292
        %400 = vmatprep.subr.bf16.mxu0 %v295
        %401 = vmatpush1.bf16.msra.mxu0 %v294
        %402 = vmatprep.subr.bf16.mxu0 %v297
        %403 = vmatpush1.bf16.msra.mxu0 %v296
        %404 = vmatprep.subr.bf16.mxu0 %v299
        %405 = vmatpush1.bf16.msra.mxu0 %v298
        %406 = vmatprep.subr.bf16.mxu0 0
        %407 = vmatpush1.bf16.msra.mxu0 0
        %408 = vmatprep.subr.bf16.mxu0 0
        %409 = vmatpush1.bf16.msra.mxu0 0
        %410 = vmatprep.subr.bf16.mxu0 0
        %411 = vmatpush1.bf16.msra.mxu0 0
        %412 = vmatprep.subr.bf16.mxu0 0
        %413 = vmatpush1.bf16.msra.mxu0 0
        %414 = vmatprep.subr.bf16.mxu0 0
        %415 = vmatpush1.bf16.msra.mxu0 0
        %416 = vmatprep.subr.bf16.mxu0 0
        %417 = vmatpush1.bf16.msra.mxu0 0
        %418 = vmatprep.subr.bf16.mxu0 0
        %419 = vmatpush1.bf16.msra.mxu0 0
        %420 = vmatprep.subr.bf16.mxu0 0
        %421 = vmatpush1.bf16.msra.mxu0 0
        %422 = vmatprep.mubr.bf16.mxu0 0
        %423 = vmatmul.mubr.bf16.gmra.mrb[0].mxu0 %v376
        %v424 = vpop.f32.mrb[0].mxu0
        %v425 = vadd.f32 %v383, %v424
        %v426 = vpop.f32.mrb[0].mxu0
        %v427 = vadd.f32 %v387, %v426
        %v428 = vpop.f32.mrb[0].mxu0
        %v429 = vadd.f32 %v383, %v428
        %v430 = vpop.f32.mrb[0].mxu0
        %v431 = vadd.f32 %v387, %v430
        %432 = vmatprep.mubr.bf16.mxu0 0
        %433 = vmatmul.mubr.bf16.gmra.mrb[0].mxu0 %v377
        %v434 = vpop.f32.mrb[0].mxu0
        %v435 = vadd.f32 %v383, %v434
        %v436 = vpop.f32.mrb[0].mxu0
        %v437 = vadd.f32 %v387, %v436
        %v438 = vpop.f32.mrb[0].mxu0
        %v439 = vpop.f32.mrb[0].mxu0
        %440 = vdwg.mxu0
        %v441 = vmul.f32 %v425, 0.5
        %v442 = vmul.f32 %v427, 0.5
        %v443 = vmul.f32 %v429, 0.5
        %v444 = vmul.f32 %v431, 0.5
        %v445 = vmul.f32 %v435, 0.5
        %v446 = vmul.f32 %v437, 0.5
        %v447 = vtanh.pop %v441
        %v448 = vtanh.pop %v442
        %v449 = vtanh.pop %v443
        %v450 = vtanh.pop %v444
        %v451 = vtanh.pop %v445
        %v452 = vtanh.pop %v446
        %v453 = vmul.f32 %v447, 0.5
        %v454 = vmul.f32 %v448, 0.5
        %v455 = vmul.f32 %v449, 0.5
        %v456 = vmul.f32 %v450, 0.5
        %v457 = vmul.f32 %v451, 0.5
        %v458 = vmul.f32 %v452, 0.5
        %v459 = vadd.f32 %v453, 0.5
        %v460 = vadd.f32 %v454, 0.5
        %v461 = vadd.f32 %v455, 0.5
        %v462 = vadd.f32 %v456, 0.5
        %v463 = vadd.f32 %v457, 0.5
        %v464 = vadd.f32 %v458, 0.5
        %465 = vst [vmem:[%s193] sm:$0xff] %v459
        %466 = vst [vmem:[%s193 + $0x8] sm:$0xff] %v460
        %467 = vst [vmem:[%s193 + $0x10] sm:$0xff] %v461
        %468 = vst [vmem:[%s193 + $0x18] sm:$0xff] %v462
        %469 = vst [vmem:[%s193 + $0x20] sm:$0xff] %v463
        %470 = vst [vmem:[%s193 + $0x28] sm:$0xff] %v464
        %s471 = sand.u32 %s115, 1
        %s472 = scalar_lea.sflag [#allocation3], %s471
        %s473 = sand.u32 %s115, 1
        %s474 = smul.addr %s473, 48
        %s475 = scalar_lea.vmem [#allocation2], %s474
        // Predicated region
        $region37: #{rbm_forward.1} parent=35 // pred_check
          %p476 = pneg %p125
        $region38: #{rbm_forward.1} parent=35 // pred_check_branch
          %478 = sbr.rel (%p476) target = $region40
        $region39: #{rbm_forward.1} parent=35 // pred_region
          %s479 = smul.u32 3, %s18
          %s481 = ssub.s32 768, 768
          %482 = vsyncadd %s472, %s481
          %s483 = smul.addr %s479, 2
          %s484 = smul.addr %s483, 128
          %s485 = scalar_lea.hbm %s4, %s484
          %s486 = sshll.u32 %s475, 4
          %s487 = int_to_ptr.vmem [resolvable:$true] %s486
          %492 = dma.vmem_to_hbm [thread:$0]  %s487, 768, %s485, %s472, 256, 256, 16
        $region40: #{rbm_forward.1} parent=35 // pred_fallthru
          _
      $region36: #{rbm_forward.1} parent=5 // pred_fallthru
        _
      %p493 = scmp.le.s32.totalorder 2, %s13
      // Predicated region
      $region41: #{rbm_forward.1} parent=5 // pred_check
        %p494 = pneg %p493
      $region42: #{rbm_forward.1} parent=5 // pred_check_branch
        %496 = sbr.rel (%p494) target = $region44
      $region43: #{rbm_forward.1} parent=5 // pred_region
        %s497 = ssub.s32 %s13, 2
        // Predicated region
        $region45: #{rbm_forward.1} parent=43 // pred_check
          %p498 = pneg %p131
        $region46: #{rbm_forward.1} parent=43 // pred_check_branch
          %500 = sbr.rel (%p498) target = $region48
        $region47: #{rbm_forward.1} parent=43 // pred_region
          %s501 = sand.u32 %s116, 1
          %s502 = scalar_lea.sflag [#allocation3], %s501
          %s503 = sand.u32 %s116, 1
          %s504 = smul.addr %s503, 48
          %s505 = scalar_lea.vmem [#allocation2], %s504
          %506 = dma.done %s502, 768
        $region48: #{rbm_forward.1} parent=43 // pred_fallthru
          _
      $region44: #{rbm_forward.1} parent=5 // pred_fallthru
        _
    $region6: #{rbm_forward.1} parent=1 // loop_footer
      %s17 = sadd.s32 1, %s13
    $region7: #{rbm_forward.1} parent=1 // loop_footer_branch
      %12 = sbr.rel target = $region3
    $region8: #{rbm_forward.1} parent=1 // loop_exit
      _
    %507 = vsyncpa [#allocation3], 1
    %s508 = scalar_lea.sflag [#allocation3], 1
    %509 = vsyncpa %s508, 1

</llo_original>
